<compile_context>
chip_gen: v5e
topology: v5e:2x2
jax: 0.10.0
libtpu: 0.0.40
codegen_flags: <defaults>
</compile_context>

<pallas_src>
import math

import jax
import jax.numpy as jnp
from jax import lax
from jax.experimental import pallas as pl
from jax.experimental.pallas import tpu as pltpu


# --------------------------------------------------------------------------
# Fused PointnetFPModule kernel (channels-first / points-on-lanes).
#   ut_ref  : (3, TN)    fine point coords, transposed (lane-dense in points)
#   k_ref   : (M, 3)     coarse point coords
#   fw_ref  : (C1, M)    W_top @ known_feats  (precomputed per batch, bf16)
#   s_ref   : (Cs, TN)   skip features tile (channels-first, bf16)
#   w1b_ref : (C1, Cs)   first conv weight cols hitting the skip part (bf16)
#   b1_ref  : (C1, 1)    folded-BN bias, layer 1 (f32)
#   rest    : (w_l, b_l) for layers 2..L, then o_ref : (C_out, TN)
# --------------------------------------------------------------------------
def _make_fp_kernel(num_extra_layers):
    def kernel(ut_ref, k_ref, fw_ref, s_ref, w1b_ref, b1_ref, *rest):
        o_ref = rest[-1]
        extra = rest[:-1]

        ut = ut_ref[...]                    # (3, TN)  f32
        k = k_ref[...]                      # (M, 3)   f32
        m = k.shape[0]
        tn = ut.shape[1]

        # -- squared pairwise distances as (M, TN): 3 VPU rank-1 updates ------
        d = jnp.zeros((m, tn), jnp.float32)
        for c in range(3):
            dc = k[:, c:c + 1] - ut[c:c + 1, :]          # (M,1)-(1,TN) -> (M,TN)
            d = d + dc * dc

        # -- top-3 NN + inverse-distance weights; reductions over sublanes ----
        iota = lax.broadcasted_iota(jnp.int32, (m, tn), 0)
        big = jnp.float32(1e30)
        wmat = jnp.zeros((m, tn), jnp.float32)           # un-normalized weights
        norm = jnp.zeros((1, tn), jnp.float32)
        for _ in range(3):
            dmin = jnp.min(d, axis=0, keepdims=True)                          # (1,TN)
            idx = jnp.min(jnp.where(d <= dmin, iota, m), axis=0, keepdims=True)
            sel = iota == idx                                                  # (M,TN)
            r = 1.0 / (jnp.sqrt(dmin) + 1e-8)                                  # (1,TN)
            wmat = wmat + jnp.where(sel, r, 0.0)
            norm = norm + r
            d = jnp.where(sel, big, d)

        # -- interpolation fused with layer-1 "top" matmul:  (W_top@f) @ wmat -
        h = jnp.dot(fw_ref[...], wmat.astype(fw_ref.dtype),
                    preferred_element_type=jnp.float32)                        # (C1,TN)
        # post-matmul per-point normalization (EUP sees only TN reciprocals)
        h = h * pl.reciprocal(norm, approx=True)
        # skip branch (concat-free split matmul) + folded-BN bias + ReLU
        h = h + jnp.dot(w1b_ref[...], s_ref[...],
                        preferred_element_type=jnp.float32)
        h = jnp.maximum(h + b1_ref[...], 0.0)

        # -- remaining 1x1 Conv + BN(eval, folded) + ReLU layers --------------
        for li in range(num_extra_layers):
            w_ref = extra[2 * li]
            b_ref = extra[2 * li + 1]
            h = jnp.dot(w_ref[...], h.astype(w_ref.dtype),
                        preferred_element_type=jnp.float32)
            h = jnp.maximum(h + b_ref[...], 0.0)

        o_ref[...] = h.astype(o_ref.dtype)               # lane-dense (C_out, TN) store

    return kernel


# --------------------------------------------------------------------------
# Generation-aware VMEM / tiling policy.
# --------------------------------------------------------------------------
def _vmem_policy():
    phys = 64 << 20                      # conservative fallback (v7x per-TC VMEM)
    try:
        phys = int(pltpu.get_tpu_info().vmem_capacity_bytes)
    except Exception:
        pass
    vmem_limit = int(min(phys * 3 // 4, 96 << 20))       # 96 MiB v5e/v6e, 48 MiB v7x
    # ~8 live f32 (M, TN) temporaries must fit in roughly a third of the limit
    budget_elems = max((vmem_limit // 3) // 32, 64 * 1024)
    return vmem_limit, budget_elems


def _choose_n_tile(n, m, b, budget_elems):
    cands = [t for t in (2048, 1024, 512, 384, 256, 128) if n % t == 0]
    fits = [t for t in cands if t * max(m, 1) <= budget_elems]
    if fits:
        tn = fits[0]
        # v7x megacore: keep >= 4 grid steps when a reasonably large tile allows it
        if b * (n // tn) < 4:
            for t in fits:
                if t >= 256 and b * (n // t) >= 4:
                    tn = t
                    break
        return tn
    if cands:
        # TODO(synk): M-tile inner loop (online top-3 carry) for very large M.
        return cands[-1]
    return n                                  # n < 128 (or not a 128 multiple)


# --------------------------------------------------------------------------
# One fused PointnetFPModule forward.
#   unknown_xyz_t (B,3,N) f32, known_xyz (B,M,3) f32,
#   skip_feats (B,Cs,N) bf16, fw = W_top @ known_feats (B,C1,M) bf16
#   -> (B,C_out,N) out_dtype
# --------------------------------------------------------------------------
def fp_module_pallas(unknown_xyz_t, known_xyz, skip_feats, fw, w_bot, b1, extra,
                     out_dtype=jnp.bfloat16):
    b, _, n = unknown_xyz_t.shape
    m = known_xyz.shape[1]
    c1 = fw.shape[1]
    cs = skip_feats.shape[1]
    c_out = extra[-1][0].shape[0] if extra else c1

    vmem_limit, budget_elems = _vmem_policy()
    tn = _choose_n_tile(n, m, b, budget_elems)
    grid = (b, n // tn)

    flat_extra, extra_specs = [], []
    for (w, bb) in extra:
        flat_extra += [w, bb]
        extra_specs += [pl.BlockSpec(w.shape, lambda i, j: (0, 0)),
                        pl.BlockSpec(bb.shape, lambda i, j: (0, 0))]

    # advisory cost estimate (helps XLA overlap the host-side transpose/einsum)
    mlp_flops = 2 * n * cs * c1 + sum(2 * n * w.shape[0] * w.shape[1]
                                      for (w, _) in extra)
    flops = int(b * (9 * n * m + 2 * n * m * c1 + mlp_flops))
    transcendentals = int(8 * b * n)
    bytes_accessed = int(
        unknown_xyz_t.size * 4 + known_xyz.size * 4 + fw.size * 2
        + skip_feats.size * 2 + w_bot.size * 2 + b1.size * 4
        + sum(w.size * 2 + bb.size * 4 for (w, bb) in extra)
        + b * n * c_out * (4 if out_dtype == jnp.float32 else 2))

    return pl.pallas_call(
        _make_fp_kernel(len(extra)),
        out_shape=jax.ShapeDtypeStruct((b, c_out, n), out_dtype),
        grid=grid,
        in_specs=[
            pl.BlockSpec((None, 3, tn), lambda i, j: (i, 0, j)),    # fine xyz^T tile
            pl.BlockSpec((None, m, 3), lambda i, j: (i, 0, 0)),     # coarse xyz
            pl.BlockSpec((None, c1, m), lambda i, j: (i, 0, 0)),    # W_top @ feats
            pl.BlockSpec((None, cs, tn), lambda i, j: (i, 0, j)),   # skip tile (CF)
            pl.BlockSpec(w_bot.shape, lambda i, j: (0, 0)),         # resident weights
            pl.BlockSpec(b1.shape, lambda i, j: (0, 0)),
        ] + extra_specs,
        out_specs=pl.BlockSpec((None, c_out, tn), lambda i, j: (i, 0, j)),
        compiler_params=pltpu.CompilerParams(
            dimension_semantics=("parallel", "parallel"),
            vmem_limit_bytes=vmem_limit),
        cost_estimate=pl.CostEstimate(flops=flops,
                                      transcendentals=transcendentals,
                                      bytes_accessed=bytes_accessed),
    )(unknown_xyz_t, known_xyz, fw, skip_feats, w_bot, b1, *flat_extra)


# --------------------------------------------------------------------------
# ASSANetDecoder forward (host glue).  Features are channels-first (B, C, N),
# exactly like the PyTorch module.
# --------------------------------------------------------------------------
def assanet_decoder_forward(l_xyz, l_features, decoders_params):
    feats = [f.astype(jnp.bfloat16) for f in l_features]      # features travel bf16
    nd = len(decoders_params)
    for i in range(-1, -(nd + 1), -1):
        params = decoders_params[i]
        w_top, w_bot, b1 = params[0]
        known_feats = feats[i]                                  # (B, Ck, M)
        # associativity fusion: precompute W_top @ known_feats once per batch
        fw = jnp.einsum('oc,bcm->bom', w_top, known_feats,
                        preferred_element_type=jnp.float32).astype(jnp.bfloat16)
        unknown_xyz_t = jnp.transpose(l_xyz[i - 1], (0, 2, 1))  # (B, 3, N) glue
        out_dtype = jnp.float32 if i == -nd else jnp.bfloat16
        feats[i - 1] = fp_module_pallas(
            unknown_xyz_t, l_xyz[i], feats[i - 1], fw,
            w_bot, b1, params[1:], out_dtype=out_dtype)
    return feats[0]


# --------------------------------------------------------------------------
# Deterministic parameters (mirrors __init__ + init_weights(); BN in eval mode
# with identity statistics, scale folded into the conv weights on the host).
# Conv weights are stored (C_out, C_in), i.e. the torch Conv1d orientation.
# --------------------------------------------------------------------------
def make_fp_params(key, pre_ch, skip_ch, fp_mlp):
    chans = [pre_ch + skip_ch] + list(fp_mlp)
    params = []
    for i in range(len(chans) - 1):
        cin, cout = chans[i], chans[i + 1]
        key, sub = jax.random.split(key)
        # kaiming_normal_ on the 1x1 conv weight (fan_in = cin)
        w = jax.random.normal(sub, (cout, cin), jnp.float32) * math.sqrt(2.0 / cin)
        gamma = jnp.ones((cout,), jnp.float32)
        beta = jnp.zeros((cout,), jnp.float32)
        running_mean = jnp.zeros((cout,), jnp.float32)
        running_var = jnp.ones((cout,), jnp.float32)
        eps = 1e-5
        scale = gamma / jnp.sqrt(running_var + eps)
        bias = (beta - running_mean * scale).reshape(cout, 1)    # stays f32
        wf = (w * scale[:, None]).astype(jnp.bfloat16)           # BN scale folded
        if i == 0:
            # cols [0:pre_ch] hit the interpolated feats, the rest hit the skip
            # feats -> replaces torch.cat([interp, skip], dim=1).
            params.append((wf[:, :pre_ch], wf[:, pre_ch:], bias))
        else:
            params.append((wf, bias))
    return params, key


if __name__ == "__main__":
    # ---- synthetic config (small): width=16, depth=2, layers=2 --------------
    width_cfg, depth, layers_cfg = 16, 2, 2
    npoints = [32, 16]                      # two SA levels
    fp_mlps = [[16, 16], [32, 32]]          # one FP (decoder) per SA level

    mlps = [[[width_cfg] * layers_cfg] * depth,
            [[width_cfg * depth] * layers_cfg] * depth,
            [[width_cfg * depth ** 2] * layers_cfg] * depth,
            [[width_cfg * depth ** 3] * layers_cfg] * depth]

    # replicate the skip_channel_list / channel_out bookkeeping from __init__
    w_ch = mlps[0][0][0]
    skip_channel_list = [w_ch]
    channel_out = 0
    for k in range(len(npoints)):
        channel_list = [list(c) for c in mlps[k]]
        channel_out = 0
        for idx in range(len(channel_list)):
            channel_list[idx] = [w_ch] + channel_list[idx]
            channel_out += channel_list[idx][-1]
            w_ch = channel_list[idx][-1]
        w_ch = channel_out
        skip_channel_list.append(channel_out)
    # -> skip_channel_list == [16, 32, 64], channel_out == 64
    # -> decoder mlp channel lists == [[48, 16, 16], [96, 32, 32]]

    key = jax.random.PRNGKey(0)
    decoders_params = []
    for k in range(len(fp_mlps)):
        pre_channel = fp_mlps[k + 1][-1] if k + 1 < len(fp_mlps) else channel_out
        params, key = make_fp_params(key, pre_channel, skip_channel_list[k],
                                     fp_mlps[k])
        decoders_params.append(params)

    # ---- inputs: 3 pyramid levels (features channels-first, like PyTorch) ---
    B = 2
    level_npoints = [64] + npoints          # [64, 32, 16]
    level_channels = skip_channel_list      # [16, 32, 64]

    l_xyz, l_features = [], []
    for npt, ch in zip(level_npoints, level_channels):
        key, k1, k2 = jax.random.split(key, 3)
        l_xyz.append(jax.random.uniform(k1, (B, npt, 3), jnp.float32))
        l_features.append(jax.random.normal(k2, (B, ch, npt), jnp.float32))

    out = assanet_decoder_forward(l_xyz, l_features, decoders_params)
    out = jax.block_until_ready(out)
    assert out.shape == (B, fp_mlps[0][-1], level_npoints[0])
    assert out.dtype == jnp.float32
    assert bool(jnp.all(jnp.isfinite(out)))
    print("KERNEL_OK")
</pallas_src>

<mosaic_0001>
module attributes {stable_mosaic.version = 11 : i64} {
  func.func @kernel(%arg0: i32, %arg1: i32, %arg2: memref<1x3x32xf32, #tpu.memory_space<vmem>>, %arg3: memref<1x16x3xf32, #tpu.memory_space<vmem>>, %arg4: memref<1x32x16xbf16, #tpu.memory_space<vmem>>, %arg5: memref<1x32x32xbf16, #tpu.memory_space<vmem>>, %arg6: memref<32x32xbf16, #tpu.memory_space<vmem>>, %arg7: memref<32x1xf32, #tpu.memory_space<vmem>>, %arg8: memref<32x32xbf16, #tpu.memory_space<vmem>>, %arg9: memref<32x1xf32, #tpu.memory_space<vmem>>, %arg10: memref<1x32x32xbf16, #tpu.memory_space<vmem>>) attributes {dimension_semantics = [#tpu.dimension_semantics<parallel>, #tpu.dimension_semantics<parallel>], iteration_bounds = array<i64: 2, 1>, scalar_prefetch = 0 : i64, scratch_operands = 0 : i64, tpu.core_type = #tpu.core_type<tc>, window_params = [{transform_indices = @transform_0, window_bounds = array<i64: 1, 3, 32>}, {transform_indices = @transform_1, window_bounds = array<i64: 1, 16, 3>}, {transform_indices = @transform_2, window_bounds = array<i64: 1, 32, 16>}, {transform_indices = @transform_3, window_bounds = array<i64: 1, 32, 32>}, {pipeline_mode = #tpu.pipeline_mode<synchronous>, transform_indices = @transform_4, window_bounds = array<i64: 32, 32>}, {pipeline_mode = #tpu.pipeline_mode<synchronous>, transform_indices = @transform_5, window_bounds = array<i64: 32, 1>}, {pipeline_mode = #tpu.pipeline_mode<synchronous>, transform_indices = @transform_6, window_bounds = array<i64: 32, 32>}, {pipeline_mode = #tpu.pipeline_mode<synchronous>, transform_indices = @transform_7, window_bounds = array<i64: 32, 1>}, {transform_indices = @transform_8, window_bounds = array<i64: 1, 32, 32>}]} {
    %c0 = arith.constant 0 : index
    %c0_0 = arith.constant 0 : index
    %c0_1 = arith.constant 0 : index
    %0 = vector.load %arg2[%c0, %c0_0, %c0_1] : memref<1x3x32xf32, #tpu.memory_space<vmem>>, vector<1x3x32xf32>
    %1 = vector.shape_cast %0 : vector<1x3x32xf32> to vector<3x32xf32>
    %c0_2 = arith.constant 0 : index
    %c0_3 = arith.constant 0 : index
    %c0_4 = arith.constant 0 : index
    %2 = vector.load %arg3[%c0_2, %c0_3, %c0_4] : memref<1x16x3xf32, #tpu.memory_space<vmem>>, vector<1x16x3xf32>
    %3 = vector.shape_cast %2 : vector<1x16x3xf32> to vector<16x3xf32>
    %cst = arith.constant 0.000000e+00 : f32
    %4 = vector.broadcast %cst : f32 to vector<16x32xf32>
    %5 = vector.extract_strided_slice %3 {offsets = [0, 0], sizes = [16, 1], strides = [1, 1]} : vector<16x3xf32> to vector<16x1xf32>
    %6 = vector.extract_strided_slice %1 {offsets = [0, 0], sizes = [1, 32], strides = [1, 1]} : vector<3x32xf32> to vector<1x32xf32>
    %7 = vector.broadcast %5 : vector<16x1xf32> to vector<16x32xf32>
    %8 = vector.broadcast %6 : vector<1x32xf32> to vector<16x32xf32>
    %9 = arith.subf %7, %8 : vector<16x32xf32>
    %10 = arith.mulf %9, %9 : vector<16x32xf32>
    %11 = arith.addf %4, %10 : vector<16x32xf32>
    %12 = vector.extract_strided_slice %3 {offsets = [0, 1], sizes = [16, 1], strides = [1, 1]} : vector<16x3xf32> to vector<16x1xf32>
    %13 = vector.extract_strided_slice %1 {offsets = [1, 0], sizes = [1, 32], strides = [1, 1]} : vector<3x32xf32> to vector<1x32xf32>
    %14 = vector.broadcast %12 : vector<16x1xf32> to vector<16x32xf32>
    %15 = vector.broadcast %13 : vector<1x32xf32> to vector<16x32xf32>
    %16 = arith.subf %14, %15 : vector<16x32xf32>
    %17 = arith.mulf %16, %16 : vector<16x32xf32>
    %18 = arith.addf %11, %17 : vector<16x32xf32>
    %19 = vector.extract_strided_slice %3 {offsets = [0, 2], sizes = [16, 1], strides = [1, 1]} : vector<16x3xf32> to vector<16x1xf32>
    %20 = vector.extract_strided_slice %1 {offsets = [2, 0], sizes = [1, 32], strides = [1, 1]} : vector<3x32xf32> to vector<1x32xf32>
    %21 = vector.broadcast %19 : vector<16x1xf32> to vector<16x32xf32>
    %22 = vector.broadcast %20 : vector<1x32xf32> to vector<16x32xf32>
    %23 = arith.subf %21, %22 : vector<16x32xf32>
    %24 = arith.mulf %23, %23 : vector<16x32xf32>
    %25 = arith.addf %18, %24 : vector<16x32xf32>
    %26 = tpu.iota {dimensions = array<i32: 0>} : vector<16x32xi32>
    %cst_5 = arith.constant 0.000000e+00 : f32
    %27 = vector.broadcast %cst_5 : f32 to vector<16x32xf32>
    %cst_6 = arith.constant 0.000000e+00 : f32
    %28 = vector.broadcast %cst_6 : f32 to vector<1x32xf32>
    %cst_7 = arith.constant dense<0x7F800000> : vector<32xf32>
    %29 = vector.multi_reduction <minimumf>, %25, %cst_7 [0] : vector<16x32xf32> to vector<32xf32>
    %30 = vector.shape_cast %29 : vector<32xf32> to vector<1x32xf32>
    %31 = vector.broadcast %30 : vector<1x32xf32> to vector<16x32xf32>
    %32 = arith.cmpf ole, %25, %31 : vector<16x32xf32>
    %c16_i32 = arith.constant 16 : i32
    %33 = vector.broadcast %c16_i32 : i32 to vector<16x32xi32>
    %34 = arith.select %32, %26, %33 : vector<16x32xi1>, vector<16x32xi32>
    %cst_8 = arith.constant dense<2147483647> : vector<32xi32>
    %35 = vector.multi_reduction <minsi>, %34, %cst_8 [0] : vector<16x32xi32> to vector<32xi32>
    %36 = vector.shape_cast %35 : vector<32xi32> to vector<1x32xi32>
    %37 = vector.broadcast %36 : vector<1x32xi32> to vector<16x32xi32>
    %38 = arith.cmpi eq, %26, %37 : vector<16x32xi32>
    %39 = math.sqrt %30 : vector<1x32xf32>
    %cst_9 = arith.constant 9.99999993E-9 : f32
    %40 = vector.broadcast %cst_9 : f32 to vector<1x32xf32>
    %41 = arith.addf %39, %40 : vector<1x32xf32>
    %cst_10 = arith.constant 1.000000e+00 : f32
    %42 = vector.broadcast %cst_10 : f32 to vector<1x32xf32>
    %43 = arith.divf %42, %41 : vector<1x32xf32>
    %cst_11 = arith.constant 0.000000e+00 : f32
    %44 = vector.shape_cast %43 : vector<1x32xf32> to vector<1x32xf32>
    %45 = vector.broadcast %44 : vector<1x32xf32> to vector<16x32xf32>
    %46 = vector.broadcast %cst_11 : f32 to vector<16x32xf32>
    %47 = arith.select %38, %45, %46 : vector<16x32xi1>, vector<16x32xf32>
    %48 = arith.addf %27, %47 : vector<16x32xf32>
    %49 = arith.addf %28, %43 : vector<1x32xf32>
    %cst_12 = arith.constant 1.000000e+30 : f32
    %50 = vector.broadcast %cst_12 : f32 to vector<16x32xf32>
    %51 = arith.select %38, %50, %25 : vector<16x32xi1>, vector<16x32xf32>
    %cst_13 = arith.constant dense<0x7F800000> : vector<32xf32>
    %52 = vector.multi_reduction <minimumf>, %51, %cst_13 [0] : vector<16x32xf32> to vector<32xf32>
    %53 = vector.shape_cast %52 : vector<32xf32> to vector<1x32xf32>
    %54 = vector.broadcast %53 : vector<1x32xf32> to vector<16x32xf32>
    %55 = arith.cmpf ole, %51, %54 : vector<16x32xf32>
    %c16_i32_14 = arith.constant 16 : i32
    %56 = vector.broadcast %c16_i32_14 : i32 to vector<16x32xi32>
    %57 = arith.select %55, %26, %56 : vector<16x32xi1>, vector<16x32xi32>
    %cst_15 = arith.constant dense<2147483647> : vector<32xi32>
    %58 = vector.multi_reduction <minsi>, %57, %cst_15 [0] : vector<16x32xi32> to vector<32xi32>
    %59 = vector.shape_cast %58 : vector<32xi32> to vector<1x32xi32>
    %60 = vector.broadcast %59 : vector<1x32xi32> to vector<16x32xi32>
    %61 = arith.cmpi eq, %26, %60 : vector<16x32xi32>
    %62 = math.sqrt %53 : vector<1x32xf32>
    %cst_16 = arith.constant 9.99999993E-9 : f32
    %63 = vector.broadcast %cst_16 : f32 to vector<1x32xf32>
    %64 = arith.addf %62, %63 : vector<1x32xf32>
    %cst_17 = arith.constant 1.000000e+00 : f32
    %65 = vector.broadcast %cst_17 : f32 to vector<1x32xf32>
    %66 = arith.divf %65, %64 : vector<1x32xf32>
    %cst_18 = arith.constant 0.000000e+00 : f32
    %67 = vector.shape_cast %66 : vector<1x32xf32> to vector<1x32xf32>
    %68 = vector.broadcast %67 : vector<1x32xf32> to vector<16x32xf32>
    %69 = vector.broadcast %cst_18 : f32 to vector<16x32xf32>
    %70 = arith.select %61, %68, %69 : vector<16x32xi1>, vector<16x32xf32>
    %71 = arith.addf %48, %70 : vector<16x32xf32>
    %72 = arith.addf %49, %66 : vector<1x32xf32>
    %cst_19 = arith.constant 1.000000e+30 : f32
    %73 = vector.broadcast %cst_19 : f32 to vector<16x32xf32>
    %74 = arith.select %61, %73, %51 : vector<16x32xi1>, vector<16x32xf32>
    %cst_20 = arith.constant dense<0x7F800000> : vector<32xf32>
    %75 = vector.multi_reduction <minimumf>, %74, %cst_20 [0] : vector<16x32xf32> to vector<32xf32>
    %76 = vector.shape_cast %75 : vector<32xf32> to vector<1x32xf32>
    %77 = vector.broadcast %76 : vector<1x32xf32> to vector<16x32xf32>
    %78 = arith.cmpf ole, %74, %77 : vector<16x32xf32>
    %c16_i32_21 = arith.constant 16 : i32
    %79 = vector.broadcast %c16_i32_21 : i32 to vector<16x32xi32>
    %80 = arith.select %78, %26, %79 : vector<16x32xi1>, vector<16x32xi32>
    %cst_22 = arith.constant dense<2147483647> : vector<32xi32>
    %81 = vector.multi_reduction <minsi>, %80, %cst_22 [0] : vector<16x32xi32> to vector<32xi32>
    %82 = vector.shape_cast %81 : vector<32xi32> to vector<1x32xi32>
    %83 = vector.broadcast %82 : vector<1x32xi32> to vector<16x32xi32>
    %84 = arith.cmpi eq, %26, %83 : vector<16x32xi32>
    %85 = math.sqrt %76 : vector<1x32xf32>
    %cst_23 = arith.constant 9.99999993E-9 : f32
    %86 = vector.broadcast %cst_23 : f32 to vector<1x32xf32>
    %87 = arith.addf %85, %86 : vector<1x32xf32>
    %cst_24 = arith.constant 1.000000e+00 : f32
    %88 = vector.broadcast %cst_24 : f32 to vector<1x32xf32>
    %89 = arith.divf %88, %87 : vector<1x32xf32>
    %cst_25 = arith.constant 0.000000e+00 : f32
    %90 = vector.shape_cast %89 : vector<1x32xf32> to vector<1x32xf32>
    %91 = vector.broadcast %90 : vector<1x32xf32> to vector<16x32xf32>
    %92 = vector.broadcast %cst_25 : f32 to vector<16x32xf32>
    %93 = arith.select %84, %91, %92 : vector<16x32xi1>, vector<16x32xf32>
    %94 = arith.addf %71, %93 : vector<16x32xf32>
    %95 = arith.addf %72, %89 : vector<1x32xf32>
    %c0_26 = arith.constant 0 : index
    %c0_27 = arith.constant 0 : index
    %c0_28 = arith.constant 0 : index
    %96 = vector.load %arg4[%c0_26, %c0_27, %c0_28] : memref<1x32x16xbf16, #tpu.memory_space<vmem>>, vector<1x32x16xbf16>
    %97 = vector.shape_cast %96 : vector<1x32x16xbf16> to vector<32x16xbf16>
    %98 = arith.truncf %94 : vector<16x32xf32> to vector<16x32xbf16>
    %cst_29 = arith.constant dense<0.000000e+00> : vector<32x32xf32>
    %99 = tpu.matmul %97, %98, %cst_29 {dimension_numbers = #tpu.dot_dimension_numbers<[1], [0], [0], [1], [0, 0, 1, 1], [], []>} : vector<32x16xbf16>, vector<16x32xbf16>, vector<32x32xf32> -> vector<32x32xf32>
    %100 = tpu.reciprocal %95 {approx = true} : vector<1x32xf32> -> vector<1x32xf32>
    %101 = vector.broadcast %100 : vector<1x32xf32> to vector<32x32xf32>
    %102 = arith.mulf %99, %101 : vector<32x32xf32>
    %c0_30 = arith.constant 0 : index
    %c0_31 = arith.constant 0 : index
    %103 = vector.load %arg6[%c0_30, %c0_31] : memref<32x32xbf16, #tpu.memory_space<vmem>>, vector<32x32xbf16>
    %c0_32 = arith.constant 0 : index
    %c0_33 = arith.constant 0 : index
    %c0_34 = arith.constant 0 : index
    %104 = vector.load %arg5[%c0_32, %c0_33, %c0_34] : memref<1x32x32xbf16, #tpu.memory_space<vmem>>, vector<1x32x32xbf16>
    %105 = vector.shape_cast %104 : vector<1x32x32xbf16> to vector<32x32xbf16>
    %cst_35 = arith.constant dense<0.000000e+00> : vector<32x32xf32>
    %106 = tpu.matmul %103, %105, %cst_35 {dimension_numbers = #tpu.dot_dimension_numbers<[1], [0], [0], [1], [0, 0, 1, 1], [], []>} : vector<32x32xbf16>, vector<32x32xbf16>, vector<32x32xf32> -> vector<32x32xf32>
    %107 = arith.addf %102, %106 : vector<32x32xf32>
    %c0_36 = arith.constant 0 : index
    %c0_37 = arith.constant 0 : index
    %108 = vector.load %arg7[%c0_36, %c0_37] : memref<32x1xf32, #tpu.memory_space<vmem>>, vector<32x1xf32>
    %109 = vector.broadcast %108 : vector<32x1xf32> to vector<32x32xf32>
    %110 = arith.addf %107, %109 : vector<32x32xf32>
    %cst_38 = arith.constant 0.000000e+00 : f32
    %111 = vector.broadcast %cst_38 : f32 to vector<32x32xf32>
    %112 = arith.maximumf %110, %111 : vector<32x32xf32>
    %c0_39 = arith.constant 0 : index
    %c0_40 = arith.constant 0 : index
    %113 = vector.load %arg8[%c0_39, %c0_40] : memref<32x32xbf16, #tpu.memory_space<vmem>>, vector<32x32xbf16>
    %114 = arith.truncf %112 : vector<32x32xf32> to vector<32x32xbf16>
    %cst_41 = arith.constant dense<0.000000e+00> : vector<32x32xf32>
    %115 = tpu.matmul %113, %114, %cst_41 {dimension_numbers = #tpu.dot_dimension_numbers<[1], [0], [0], [1], [0, 0, 1, 1], [], []>} : vector<32x32xbf16>, vector<32x32xbf16>, vector<32x32xf32> -> vector<32x32xf32>
    %c0_42 = arith.constant 0 : index
    %c0_43 = arith.constant 0 : index
    %116 = vector.load %arg9[%c0_42, %c0_43] : memref<32x1xf32, #tpu.memory_space<vmem>>, vector<32x1xf32>
    %117 = vector.broadcast %116 : vector<32x1xf32> to vector<32x32xf32>
    %118 = arith.addf %115, %117 : vector<32x32xf32>
    %cst_44 = arith.constant 0.000000e+00 : f32
    %119 = vector.broadcast %cst_44 : f32 to vector<32x32xf32>
    %120 = arith.maximumf %118, %119 : vector<32x32xf32>
    %121 = arith.truncf %120 : vector<32x32xf32> to vector<32x32xbf16>
    %c0_45 = arith.constant 0 : index
    %c0_46 = arith.constant 0 : index
    %c0_47 = arith.constant 0 : index
    %122 = vector.load %arg10[%c0_45, %c0_46, %c0_47] : memref<1x32x32xbf16, #tpu.memory_space<vmem>>, vector<1x32x32xbf16>
    %123 = vector.shape_cast %122 : vector<1x32x32xbf16> to vector<32x32xbf16>
    %124 = vector.shape_cast %121 : vector<32x32xbf16> to vector<1x32x32xbf16>
    tpu.vector_store %arg10[%c0_45, %c0_46, %c0_47], %124 {strides = array<i32>} : memref<1x32x32xbf16, #tpu.memory_space<vmem>>, vector<1x32x32xbf16>,
    return
  }
  func.func @transform_0(%arg0: i32, %arg1: i32) -> (i32, i32, i32) {
    %c0_i32 = arith.constant 0 : i32
    %c0_i32_0 = arith.constant 0 : i32
    return %arg0, %c0_i32, %arg1 : i32, i32, i32
  }
  func.func @transform_1(%arg0: i32, %arg1: i32) -> (i32, i32, i32) {
    %c0_i32 = arith.constant 0 : i32
    %c0_i32_0 = arith.constant 0 : i32
    %c0_i32_1 = arith.constant 0 : i32
    return %arg0, %c0_i32, %c0_i32_0 : i32, i32, i32
  }
  func.func @transform_2(%arg0: i32, %arg1: i32) -> (i32, i32, i32) {
    %c0_i32 = arith.constant 0 : i32
    %c0_i32_0 = arith.constant 0 : i32
    %c0_i32_1 = arith.constant 0 : i32
    return %arg0, %c0_i32, %c0_i32_0 : i32, i32, i32
  }
  func.func @transform_3(%arg0: i32, %arg1: i32) -> (i32, i32, i32) {
    %c0_i32 = arith.constant 0 : i32
    %c0_i32_0 = arith.constant 0 : i32
    return %arg0, %c0_i32, %arg1 : i32, i32, i32
  }
  func.func @transform_4(%arg0: i32, %arg1: i32) -> (i32, i32) {
    %c0_i32 = arith.constant 0 : i32
    %c0_i32_0 = arith.constant 0 : i32
    %c0_i32_1 = arith.constant 0 : i32
    return %c0_i32, %c0_i32_0 : i32, i32
  }
  func.func @transform_5(%arg0: i32, %arg1: i32) -> (i32, i32) {
    %c0_i32 = arith.constant 0 : i32
    %c0_i32_0 = arith.constant 0 : i32
    %c0_i32_1 = arith.constant 0 : i32
    return %c0_i32, %c0_i32_0 : i32, i32
  }
  func.func @transform_6(%arg0: i32, %arg1: i32) -> (i32, i32) {
    %c0_i32 = arith.constant 0 : i32
    %c0_i32_0 = arith.constant 0 : i32
    %c0_i32_1 = arith.constant 0 : i32
    return %c0_i32, %c0_i32_0 : i32, i32
  }
  func.func @transform_7(%arg0: i32, %arg1: i32) -> (i32, i32) {
    %c0_i32 = arith.constant 0 : i32
    %c0_i32_0 = arith.constant 0 : i32
    %c0_i32_1 = arith.constant 0 : i32
    return %c0_i32, %c0_i32_0 : i32, i32
  }
  func.func @transform_8(%arg0: i32, %arg1: i32) -> (i32, i32, i32) {
    %c0_i32 = arith.constant 0 : i32
    %c0_i32_0 = arith.constant 0 : i32
    return %arg0, %c0_i32, %arg1 : i32, i32, i32
  }
}

</mosaic_0001>

<llo_original>
// kernel: tpu_custom_call.1
$region0: #{tpu_custom_call.1}
  #allocation0 [shape = 'u32[]', space=smem, size = 0x4, offset = 0x4, fixed_abs, tag = 'smem constant byte address 0x4 - core index']
  #allocation1 [shape = 'u32[72,128]{1,0:T(1,128)}', space=vmem, size = 0x9000, scoped, tag = 'internal scratch']
  %s0 = inlined_call_operand.vmem [shape: f32[2,3,32], index: 0, kind: input, shape index: {}]
  %s1 = inlined_call_operand.vmem [shape: f32[2,16,3], index: 1, kind: input, shape index: {}]
  %s2 = inlined_call_operand.vmem [shape: bf16[2,32,16], index: 2, kind: input, shape index: {}]
  %s3 = inlined_call_operand.vmem [shape: bf16[2,32,32], index: 3, kind: input, shape index: {}]
  %s4 = inlined_call_operand.vmem [shape: bf16[32,32], index: 4, kind: input, shape index: {}]
  %s5 = inlined_call_operand.vmem [shape: f32[32,1], index: 5, kind: input, shape index: {}]
  %s6 = inlined_call_operand.vmem [shape: bf16[32,32], index: 6, kind: input, shape index: {}]
  %s7 = inlined_call_operand.vmem [shape: f32[32,1], index: 7, kind: input, shape index: {}]
  %s8 = inlined_call_operand.hbm [shape: bf16[2,32,32], index: 8, kind: output, shape index: {}]
  %s9 = sld [smem:[#allocation0]]
  $region65: #{tpu_custom_call.1} parent=0
    _
  %s11 = ssub.s32 1, %s9
  %s12 = scalar_select 0, %s11, %s9
  $region1: #{tpu_custom_call.1} parent=0
    #allocation2 [shape = 'u8[16384]{0}', space=vmem, size = 0x4000, scoped, tag = 'output window, operand 0']
    #allocation3 [shape = 's32[2]{0}', space=sflag, size = 0x8, scoped, tag = 'scoped memory for tpu_custom_call.1']
    %13 = vsyncpa [#allocation3], 0
    %s14 = scalar_lea.sflag [#allocation3], 1
    %15 = vsyncpa %s14, 0
    loop: start=0, step=1, limit=4
    $region2: #{tpu_custom_call.1} parent=1 // loop_pre_header
      _
    $region3: #{tpu_custom_call.1} parent=1 // loop_header
      %s17 = sphi 0, %s21
      %p18 = scmp.ge.s32.totalorder %s17, 4
      %s24 = sphi 0, %s36
      %s25 = sphi 0, %s32
      %s26 = sphi 0, %s24
      %s27 = sphi 0, %s25
      %s28 = sphi 0, %s26
      %s29 = sphi 0, %s27
      %s41 = sphi 0, %s43
      %s44 = sphi 0, %s41
      %s45 = sphi 0, %s44
      %s61 = sphi 0, %s45
      %s67 = sphi 0, %s69
      %s70 = sphi 0, %s67
      %s71 = sphi 0, %s70
      %s87 = sphi 0, %s71
      %s93 = sphi 0, %s95
      %s96 = sphi 0, %s93
      %s97 = sphi 0, %s96
      %s113 = sphi 0, %s97
      %s121 = sphi 0, %s123
      %s124 = sphi 0, %s121
      %s125 = sphi 0, %s124
      %s141 = sphi 0, %s125
      %s145 = sphi 0, %s145
      %s147 = sphi 0, %s145
      %s148 = sphi 0, %s147
      %s162 = sphi 0, %s148
      %s166 = sphi 0, %s166
      %s168 = sphi 0, %s166
      %s169 = sphi 0, %s168
      %s183 = sphi 0, %s169
      %s187 = sphi 0, %s187
      %s189 = sphi 0, %s187
      %s190 = sphi 0, %s189
      %s204 = sphi 0, %s190
      %s208 = sphi 0, %s208
      %s210 = sphi 0, %s208
      %s211 = sphi 0, %s210
      %s225 = sphi 0, %s211
      %s233 = sphi 0, %s235
      %s236 = sphi 0, %s233
      %s237 = sphi 0, %s236
      %s253 = sphi 0, %s237
    $region4: #{tpu_custom_call.1} parent=1 // loop_header_branch
      %20 = sbr.rel (%p18) target = $region8
    $region5: #{tpu_custom_call.1} parent=1 // loop_body
      %s22 = ssub.s32 %s17, 1
      %s23 = ssub.s32 %s17, 2
      %s30 = sadd.s32 1, %s25
      %p31 = scmp.ge.s32.totalorder %s30, 1
      %s32 = scalar_select %p31, 0, %s30
      %s33 = sadd.s32 1, %s24
      %s34 = scalar_select %p31, %s33, %s24
      %p35 = scmp.ge.s32.totalorder %s34, 2
      %s36 = scalar_select %p35, 0, %s34
      %s37 = ssub.s32 %s24, %s36
      %s38 = ssub.s32 %s25, %s32
      %s39 = sor.u32 %s37, %s38
      %p40 = scmp.eq.s32.totalorder %s39, 0
      %s42 = sadd.s32 %s41, 1
      %s43 = scalar_select %p40, %s41, %s42
      %p46 = pneg %p40
      %p47 = scmp.eq.s32.totalorder %s17, 1
      %p48 = por %p46, %p47
      %p49 = scmp.ne.s32.totalorder %s41, %s44
      %p50 = scmp.eq.s32.totalorder %s17, 0
      %p51 = por %p49, %p50
      %p52 = scmp.ne.s32.totalorder %s41, %s44
      %p53 = scmp.eq.s32.totalorder %s22, 1
      %p54 = por %p52, %p53
      %p55 = scmp.ne.s32.totalorder %s44, %s45
      %p56 = scmp.eq.s32.totalorder %s22, 0
      %p57 = por %p55, %p56
      %p58 = scmp.ne.s32.totalorder %s44, %s45
      %p59 = scmp.eq.s32.totalorder %s23, 1
      %p60 = por %p58, %p59
      %p62 = scmp.ne.s32.totalorder %s45, %s61
      %p63 = scmp.eq.s32.totalorder %s23, 0
      %p64 = por %p62, %p63
      %s65 = ssub.s32 %s24, %s36
      %p66 = scmp.eq.s32.totalorder %s65, 0
      %s68 = sadd.s32 %s67, 1
      %s69 = scalar_select %p66, %s67, %s68
      %p72 = pneg %p66
      %p73 = scmp.eq.s32.totalorder %s17, 1
      %p74 = por %p72, %p73
      %p75 = scmp.ne.s32.totalorder %s67, %s70
      %p76 = scmp.eq.s32.totalorder %s17, 0
      %p77 = por %p75, %p76
      %p78 = scmp.ne.s32.totalorder %s67, %s70
      %p79 = scmp.eq.s32.totalorder %s22, 1
      %p80 = por %p78, %p79
      %p81 = scmp.ne.s32.totalorder %s70, %s71
      %p82 = scmp.eq.s32.totalorder %s22, 0
      %p83 = por %p81, %p82
      %p84 = scmp.ne.s32.totalorder %s70, %s71
      %p85 = scmp.eq.s32.totalorder %s23, 1
      %p86 = por %p84, %p85
      %p88 = scmp.ne.s32.totalorder %s71, %s87
      %p89 = scmp.eq.s32.totalorder %s23, 0
      %p90 = por %p88, %p89
      %s91 = ssub.s32 %s24, %s36
      %p92 = scmp.eq.s32.totalorder %s91, 0
      %s94 = sadd.s32 %s93, 1
      %s95 = scalar_select %p92, %s93, %s94
      %p98 = pneg %p92
      %p99 = scmp.eq.s32.totalorder %s17, 1
      %p100 = por %p98, %p99
      %p101 = scmp.ne.s32.totalorder %s93, %s96
      %p102 = scmp.eq.s32.totalorder %s17, 0
      %p103 = por %p101, %p102
      %p104 = scmp.ne.s32.totalorder %s93, %s96
      %p105 = scmp.eq.s32.totalorder %s22, 1
      %p106 = por %p104, %p105
      %p107 = scmp.ne.s32.totalorder %s96, %s97
      %p108 = scmp.eq.s32.totalorder %s22, 0
      %p109 = por %p107, %p108
      %p110 = scmp.ne.s32.totalorder %s96, %s97
      %p111 = scmp.eq.s32.totalorder %s23, 1
      %p112 = por %p110, %p111
      %p114 = scmp.ne.s32.totalorder %s97, %s113
      %p115 = scmp.eq.s32.totalorder %s23, 0
      %p116 = por %p114, %p115
      %s117 = ssub.s32 %s24, %s36
      %s118 = ssub.s32 %s25, %s32
      %s119 = sor.u32 %s117, %s118
      %p120 = scmp.eq.s32.totalorder %s119, 0
      %s122 = sadd.s32 %s121, 1
      %s123 = scalar_select %p120, %s121, %s122
      %p126 = pneg %p120
      %p127 = scmp.eq.s32.totalorder %s17, 1
      %p128 = por %p126, %p127
      %p129 = scmp.ne.s32.totalorder %s121, %s124
      %p130 = scmp.eq.s32.totalorder %s17, 0
      %p131 = por %p129, %p130
      %p132 = scmp.ne.s32.totalorder %s121, %s124
      %p133 = scmp.eq.s32.totalorder %s22, 1
      %p134 = por %p132, %p133
      %p135 = scmp.ne.s32.totalorder %s124, %s125
      %p136 = scmp.eq.s32.totalorder %s22, 0
      %p137 = por %p135, %p136
      %p138 = scmp.ne.s32.totalorder %s124, %s125
      %p139 = scmp.eq.s32.totalorder %s23, 1
      %p140 = por %p138, %p139
      %p142 = scmp.ne.s32.totalorder %s125, %s141
      %p143 = scmp.eq.s32.totalorder %s23, 0
      %p144 = por %p142, %p143
      %s146 = sadd.s32 %s145, 1
      %p149 = scmp.eq.s32.totalorder %s17, 1
      %p150 = scmp.ne.s32.totalorder %s145, %s147
      %p151 = scmp.eq.s32.totalorder %s17, 0
      %p152 = por %p150, %p151
      %p153 = scmp.ne.s32.totalorder %s145, %s147
      %p154 = scmp.eq.s32.totalorder %s22, 1
      %p155 = por %p153, %p154
      %p156 = scmp.ne.s32.totalorder %s147, %s148
      %p157 = scmp.eq.s32.totalorder %s22, 0
      %p158 = por %p156, %p157
      %p159 = scmp.ne.s32.totalorder %s147, %s148
      %p160 = scmp.eq.s32.totalorder %s23, 1
      %p161 = por %p159, %p160
      %p163 = scmp.ne.s32.totalorder %s148, %s162
      %p164 = scmp.eq.s32.totalorder %s23, 0
      %p165 = por %p163, %p164
      %s167 = sadd.s32 %s166, 1
      %p170 = scmp.eq.s32.totalorder %s17, 1
      %p171 = scmp.ne.s32.totalorder %s166, %s168
      %p172 = scmp.eq.s32.totalorder %s17, 0
      %p173 = por %p171, %p172
      %p174 = scmp.ne.s32.totalorder %s166, %s168
      %p175 = scmp.eq.s32.totalorder %s22, 1
      %p176 = por %p174, %p175
      %p177 = scmp.ne.s32.totalorder %s168, %s169
      %p178 = scmp.eq.s32.totalorder %s22, 0
      %p179 = por %p177, %p178
      %p180 = scmp.ne.s32.totalorder %s168, %s169
      %p181 = scmp.eq.s32.totalorder %s23, 1
      %p182 = por %p180, %p181
      %p184 = scmp.ne.s32.totalorder %s169, %s183
      %p185 = scmp.eq.s32.totalorder %s23, 0
      %p186 = por %p184, %p185
      %s188 = sadd.s32 %s187, 1
      %p191 = scmp.eq.s32.totalorder %s17, 1
      %p192 = scmp.ne.s32.totalorder %s187, %s189
      %p193 = scmp.eq.s32.totalorder %s17, 0
      %p194 = por %p192, %p193
      %p195 = scmp.ne.s32.totalorder %s187, %s189
      %p196 = scmp.eq.s32.totalorder %s22, 1
      %p197 = por %p195, %p196
      %p198 = scmp.ne.s32.totalorder %s189, %s190
      %p199 = scmp.eq.s32.totalorder %s22, 0
      %p200 = por %p198, %p199
      %p201 = scmp.ne.s32.totalorder %s189, %s190
      %p202 = scmp.eq.s32.totalorder %s23, 1
      %p203 = por %p201, %p202
      %p205 = scmp.ne.s32.totalorder %s190, %s204
      %p206 = scmp.eq.s32.totalorder %s23, 0
      %p207 = por %p205, %p206
      %s209 = sadd.s32 %s208, 1
      %p212 = scmp.eq.s32.totalorder %s17, 1
      %p213 = scmp.ne.s32.totalorder %s208, %s210
      %p214 = scmp.eq.s32.totalorder %s17, 0
      %p215 = por %p213, %p214
      %p216 = scmp.ne.s32.totalorder %s208, %s210
      %p217 = scmp.eq.s32.totalorder %s22, 1
      %p218 = por %p216, %p217
      %p219 = scmp.ne.s32.totalorder %s210, %s211
      %p220 = scmp.eq.s32.totalorder %s22, 0
      %p221 = por %p219, %p220
      %p222 = scmp.ne.s32.totalorder %s210, %s211
      %p223 = scmp.eq.s32.totalorder %s23, 1
      %p224 = por %p222, %p223
      %p226 = scmp.ne.s32.totalorder %s211, %s225
      %p227 = scmp.eq.s32.totalorder %s23, 0
      %p228 = por %p226, %p227
      %s229 = ssub.s32 %s24, %s36
      %s230 = ssub.s32 %s25, %s32
      %s231 = sor.u32 %s229, %s230
      %p232 = scmp.eq.s32.totalorder %s231, 0
      %s234 = sadd.s32 %s233, 1
      %s235 = scalar_select %p232, %s233, %s234
      %p238 = pneg %p232
      %p239 = scmp.eq.s32.totalorder %s17, 1
      %p240 = por %p238, %p239
      %p241 = scmp.ne.s32.totalorder %s233, %s236
      %p242 = scmp.eq.s32.totalorder %s17, 0
      %p243 = por %p241, %p242
      %p244 = scmp.ne.s32.totalorder %s233, %s236
      %p245 = scmp.eq.s32.totalorder %s22, 1
      %p246 = por %p244, %p245
      %p247 = scmp.ne.s32.totalorder %s236, %s237
      %p248 = scmp.eq.s32.totalorder %s22, 0
      %p249 = por %p247, %p248
      %p250 = scmp.ne.s32.totalorder %s236, %s237
      %p251 = scmp.eq.s32.totalorder %s23, 1
      %p252 = por %p250, %p251
      %p254 = scmp.ne.s32.totalorder %s237, %s253
      %p255 = scmp.eq.s32.totalorder %s23, 0
      %p256 = por %p254, %p255
      %p257 = scmp.le.s32.totalorder 1, %s17
      %p258 = scmp.lt.s32.totalorder %s17, 3
      %p259 = pnand %p257, %p258
      %p260 = pneg %p259
      // Predicated region
      $region9: #{tpu_custom_call.1} parent=5 // pred_check
        _
      $region10: #{tpu_custom_call.1} parent=5 // pred_check_branch
        %262 = sbr.rel (%p259) target = $region12
      $region11: #{tpu_custom_call.1} parent=5 // pred_region
        %s263 = ssub.s32 %s17, 1
        // Predicated region
        $region13: #{tpu_custom_call.1} parent=11 // pred_check
          %p264 = pneg %p158
        $region14: #{tpu_custom_call.1} parent=11 // pred_check_branch
          %266 = sbr.rel (%p264) target = $region16
        $region15: #{tpu_custom_call.1} parent=11 // pred_region
          _
        $region16: #{tpu_custom_call.1} parent=11 // pred_fallthru
          _
        // Predicated region
        $region17: #{tpu_custom_call.1} parent=11 // pred_check
          %p267 = pneg %p179
        $region18: #{tpu_custom_call.1} parent=11 // pred_check_branch
          %269 = sbr.rel (%p267) target = $region20
        $region19: #{tpu_custom_call.1} parent=11 // pred_region
          _
        $region20: #{tpu_custom_call.1} parent=11 // pred_fallthru
          _
        // Predicated region
        $region21: #{tpu_custom_call.1} parent=11 // pred_check
          %p270 = pneg %p200
        $region22: #{tpu_custom_call.1} parent=11 // pred_check_branch
          %272 = sbr.rel (%p270) target = $region24
        $region23: #{tpu_custom_call.1} parent=11 // pred_region
          _
        $region24: #{tpu_custom_call.1} parent=11 // pred_fallthru
          _
        // Predicated region
        $region25: #{tpu_custom_call.1} parent=11 // pred_check
          %p273 = pneg %p221
        $region26: #{tpu_custom_call.1} parent=11 // pred_check_branch
          %275 = sbr.rel (%p273) target = $region28
        $region27: #{tpu_custom_call.1} parent=11 // pred_region
          _
        $region28: #{tpu_custom_call.1} parent=11 // pred_fallthru
          _
      $region12: #{tpu_custom_call.1} parent=5 // pred_fallthru
        _
      %p276 = scmp.lt.s32.totalorder %s17, 2
      // Predicated region
      $region29: #{tpu_custom_call.1} parent=5 // pred_check
        %p277 = pneg %p276
      $region30: #{tpu_custom_call.1} parent=5 // pred_check_branch
        %279 = sbr.rel (%p277) target = $region32
      $region31: #{tpu_custom_call.1} parent=5 // pred_region
        // Predicated region
        $region33: #{tpu_custom_call.1} parent=31 // pred_check
          %p280 = pneg %p51
        $region34: #{tpu_custom_call.1} parent=31 // pred_check_branch
          %282 = sbr.rel (%p280) target = $region36
        $region35: #{tpu_custom_call.1} parent=31 // pred_region
          %p283 = scmp.lt.s32.totalorder %s24, 1
          %s284 = scalar_select %p283, %s24, 1
          %p285 = scmp.lt.s32.totalorder %s25, 0
          %s286 = scalar_select %p285, %s25, 0
          %s287 = sadd.s32 %s286, %s284
          %s288 = smul.addr %s287, 4
          %s289 = scalar_lea.vmem %s0, %s288
        $region36: #{tpu_custom_call.1} parent=31 // pred_fallthru
          _
        // Predicated region
        $region37: #{tpu_custom_call.1} parent=31 // pred_check
          %p290 = pneg %p77
        $region38: #{tpu_custom_call.1} parent=31 // pred_check_branch
          %292 = sbr.rel (%p290) target = $region40
        $region39: #{tpu_custom_call.1} parent=31 // pred_region
          %p293 = scmp.lt.s32.totalorder %s24, 1
          %s294 = scalar_select %p293, %s24, 1
          %s295 = smul.addr %s294, 2
          %s296 = smul.addr %s295, 8
          %s297 = scalar_lea.vmem %s1, %s296
        $region40: #{tpu_custom_call.1} parent=31 // pred_fallthru
          _
        // Predicated region
        $region41: #{tpu_custom_call.1} parent=31 // pred_check
          %p298 = pneg %p103
        $region42: #{tpu_custom_call.1} parent=31 // pred_check_branch
          %300 = sbr.rel (%p298) target = $region44
        $region43: #{tpu_custom_call.1} parent=31 // pred_region
          %p301 = scmp.lt.s32.totalorder %s24, 1
          %s302 = scalar_select %p301, %s24, 1
          %s303 = smul.addr %s302, 4
          %s304 = smul.addr %s303, 4
          %s305 = scalar_lea.vmem %s2, %s304
        $region44: #{tpu_custom_call.1} parent=31 // pred_fallthru
          _
        // Predicated region
        $region45: #{tpu_custom_call.1} parent=31 // pred_check
          %p306 = pneg %p131
        $region46: #{tpu_custom_call.1} parent=31 // pred_check_branch
          %308 = sbr.rel (%p306) target = $region48
        $region47: #{tpu_custom_call.1} parent=31 // pred_region
          %p309 = scmp.lt.s32.totalorder %s24, 1
          %s310 = scalar_select %p309, %s24, 1
          %p311 = scmp.lt.s32.totalorder %s25, 0
          %s312 = scalar_select %p311, %s25, 0
          %s313 = smul.addr %s310, 4
          %s314 = sadd.s32 %s312, %s313
          %s315 = smul.addr %s314, 4
          %s316 = scalar_lea.vmem %s3, %s315
        $region48: #{tpu_custom_call.1} parent=31 // pred_fallthru
          _
      $region32: #{tpu_custom_call.1} parent=5 // pred_fallthru
        _
      %p317 = scmp.le.s32.totalorder 1, %s17
      %p318 = scmp.lt.s32.totalorder %s17, 3
      %p319 = pnand %p317, %p318
      %p320 = pneg %p319
      // Predicated region
      $region49: #{tpu_custom_call.1} parent=5 // pred_check
        _
      $region50: #{tpu_custom_call.1} parent=5 // pred_check_branch
        %322 = sbr.rel (%p319) target = $region52
      $region51: #{tpu_custom_call.1} parent=5 // pred_region
        %s323 = ssub.s32 %s17, 1
        %p324 = scmp.lt.s32.totalorder %s26, 1
        %s325 = scalar_select %p324, %s26, 1
        %p326 = scmp.lt.s32.totalorder %s27, 0
        %s327 = scalar_select %p326, %s27, 0
        %s328 = sadd.s32 %s327, %s325
        %s329 = smul.addr %s328, 4
        %s330 = scalar_lea.vmem %s0, %s329
        %p331 = pneg %p57
        %p332 = pneg %p54
        %p333 = scmp.lt.s32.totalorder %s26, 1
        %s334 = scalar_select %p333, %s26, 1
        %s335 = smul.addr %s334, 2
        %s336 = smul.addr %s335, 8
        %s337 = scalar_lea.vmem %s1, %s336
        %p338 = pneg %p83
        %p339 = pneg %p80
        %p340 = scmp.lt.s32.totalorder %s26, 1
        %s341 = scalar_select %p340, %s26, 1
        %s342 = smul.addr %s341, 4
        %s343 = smul.addr %s342, 4
        %s344 = scalar_lea.vmem %s2, %s343
        %p345 = pneg %p109
        %p346 = pneg %p106
        %p347 = scmp.lt.s32.totalorder %s26, 1
        %s348 = scalar_select %p347, %s26, 1
        %p349 = scmp.lt.s32.totalorder %s27, 0
        %s350 = scalar_select %p349, %s27, 0
        %s351 = smul.addr %s348, 4
        %s352 = sadd.s32 %s350, %s351
        %s353 = smul.addr %s352, 4
        %s354 = scalar_lea.vmem %s3, %s353
        %p355 = pneg %p137
        %p356 = pneg %p134
        %p357 = pneg %p158
        %p358 = pneg %p155
        %p359 = pneg %p179
        %p360 = pneg %p176
        %p361 = pneg %p200
        %p362 = pneg %p197
        %p363 = pneg %p221
        %p364 = pneg %p218
        %p365 = pneg %p249
        %p366 = pneg %p246
        %s367 = sand.u32 %s236, 1
        %s368 = scalar_lea.sflag [#allocation3], %s367
        %s369 = sand.u32 %s236, 1
        %s370 = smul.addr %s369, 16
        %s371 = scalar_lea.vmem [#allocation2], %s370
        %p372 = scmp.lt.s32.totalorder %s26, 1
        %s373 = scalar_select %p372, %s26, 1
        %p374 = scmp.lt.s32.totalorder %s27, 0
        %s375 = scalar_select %p374, %s27, 0
        %s376 = sadd.s32 %s375, %s373
        %s377 = smul.addr %s376, 4
        %s378 = scalar_lea.vmem %s0, %s377
        %p379 = scmp.lt.s32.totalorder %s26, 1
        %s380 = scalar_select %p379, %s26, 1
        %s381 = smul.addr %s380, 2
        %s382 = smul.addr %s381, 8
        %s383 = scalar_lea.vmem %s1, %s382
        %p384 = scmp.lt.s32.totalorder %s26, 1
        %s385 = scalar_select %p384, %s26, 1
        %s386 = smul.addr %s385, 4
        %s387 = smul.addr %s386, 4
        %s388 = scalar_lea.vmem %s2, %s387
        %p389 = scmp.lt.s32.totalorder %s26, 1
        %s390 = scalar_select %p389, %s26, 1
        %p391 = scmp.lt.s32.totalorder %s27, 0
        %s392 = scalar_select %p391, %s27, 0
        %s393 = smul.addr %s390, 4
        %s394 = sadd.s32 %s392, %s393
        %s395 = smul.addr %s394, 4
        %s396 = scalar_lea.vmem %s3, %s395
        %v398 = vld [vmem:[%s378] sm:$0x7]
        %v399 = vld [vmem:[%s383] sm:$0xff]
        %v400 = vld [vmem:[%s383 + $0x8] sm:$0xff]
        %402 = vset.pattern.permute.xlu0 0
        %403 = vperm.xlu0 %402, %v399
        %v404 = vpop.permute.xlu0 %403
        %407 = vset.pattern.permute.xlu0 0
        %408 = vperm.xlu0 %407, %v400
        %v409 = vpop.permute.xlu0 %408
        %v411 = vperm.slane %v398, 0
        %v412 = vsub.f32 %v404, %v411
        %v413 = vsub.f32 %v409, %v411
        %v414 = vmul.f32 %v412, %v412
        %v415 = vmul.f32 %v413, %v413
        %v416 = vadd.f32 %v414, 0.0
        %v417 = vadd.f32 %v415, 0.0
        %418 = vset.pattern.permute.xlu0 1
        %419 = vperm.xlu0 %418, %v399
        %v420 = vpop.permute.xlu0 %419
        %422 = vset.pattern.permute.xlu0 1
        %423 = vperm.xlu0 %422, %v400
        %v424 = vpop.permute.xlu0 %423
        %v426 = vperm.slane %v398, 1
        %v427 = vsub.f32 %v420, %v426
        %v428 = vsub.f32 %v424, %v426
        %v429 = vmul.f32 %v427, %v427
        %v430 = vmul.f32 %v428, %v428
        %v431 = vadd.f32 %v416, %v429
        %v432 = vadd.f32 %v417, %v430
        %433 = vset.pattern.permute.xlu0 2
        %434 = vperm.xlu0 %433, %v399
        %v435 = vpop.permute.xlu0 %434
        %437 = vset.pattern.permute.xlu0 2
        %438 = vperm.xlu0 %437, %v400
        %v439 = vpop.permute.xlu0 %438
        %v441 = vperm.slane %v398, 2
        %v442 = vsub.f32 %v435, %v441
        %v443 = vsub.f32 %v439, %v441
        %v444 = vmul.f32 %v442, %v442
        %v445 = vmul.f32 %v443, %v443
        %v446 = vadd.f32 %v431, %v444
        %v447 = vadd.f32 %v432, %v445
        %v448 = vlaneseq
        %v449 = vshrl.u32 %v448, 7
        %v450 = vadd.s32 %v449, 8
        %vm451 = vcmask 261120
        %v452 = vsel %vm451, %v446, inf
        %v453 = vsel %vm451, %v447, inf
        %v454 = vmin.f32 %v452, %v453
        %v455 = vrot.slane %v454, 4
        %v456 = vmin.f32 %v454, %v455
        %v457 = vrot.slane %v456, 2
        %v458 = vmin.f32 %v456, %v457
        %v459 = vrot.slane %v458, 1
        %v460 = vmin.f32 %v458, %v459
        %vm461 = vcmp.le.f32.partialorder %v446, %v460
        %vm462 = vcmp.le.f32.partialorder %v447, %v460
        %v463 = vsel %vm461, %v449, 16
        %v464 = vsel %vm462, %v450, 16
        %v465 = vsel %vm451, %v463, 2147483647
        %v466 = vsel %vm451, %v464, 2147483647
        %vm467 = vcmp.lt.s32.totalorder %v465, %v466
        %v468 = vsel %vm467, %v465, %v466
        %v469 = vrot.slane %v468, 4
        %vm470 = vcmp.lt.s32.totalorder %v468, %v469
        %v471 = vsel %vm470, %v468, %v469
        %v472 = vrot.slane %v471, 2
        %vm473 = vcmp.lt.s32.totalorder %v471, %v472
        %v474 = vsel %vm473, %v471, %v472
        %v475 = vrot.slane %v474, 1
        %vm476 = vcmp.lt.s32.totalorder %v474, %v475
        %v477 = vsel %vm476, %v474, %v475
        %vm478 = vcmp.eq.s32.totalorder %v449, %v477
        %vm479 = vcmp.eq.s32.totalorder %v450, %v477
        %v480 = vrsqrt.pop %v460
        %v481 = vmul.f32 %v480, %v460
        %v482 = vmul.f32 %v481, %v480
        %v483 = vmul.f32 0.5, %v482
        %v484 = vsub.f32 1.5, %v483
        %v485 = vmul.f32 %v480, %v484
        %v486 = vmul.f32 %v460, %v485
        %vm487 = vcmp.eq.f32.partialorder %v460, inf
        %v488 = vsel %vm487, %v460, %v486
        %vm489 = vcmp.eq.f32.partialorder %v460, 0.0
        %v490 = vand.u32 %v460, 2147483648
        %v491 = vsel %vm489, %v490, %v488
        %v492 = vadd.f32 %v491, 1e-08
        %v493 = vrcp.pop %v492
        %v494 = vmul.f32 %v492, %v493
        %v495 = vsub.f32 1.0, %v494
        %v496 = vmul.f32 %v493, %v495
        %v497 = vadd.f32 %v493, %v496
        %vm498 = vweird.f32 %v492
        %vm499 = vweird.f32 %v493
        %vm500 = vmor %vm498, %vm499
        %v501 = vsel %vm500, %v493, %v497
        %v502 = vand.u32 2147483647, %v492
        %vm503 = vcmp.eq.f32.partialorder %v502, 8.507059e+37
        %v504 = vand.u32 %v492, 2147483648
        %v505 = vor.u32 1.1754944e-38, %v504
        %v506 = vsel %vm503, %v505, %v501
        %v507 = vmul.f32 1.0, %v506
        %v508 = vsel %vm478, %v507, 0.0
        %v509 = vsel %vm479, %v507, 0.0
        %v510 = vadd.f32 %v508, 0.0
        %v511 = vadd.f32 %v509, 0.0
        %v512 = vadd.f32 %v507, 0.0
        %v513 = vsel %vm478, 1e+30, %v446
        %v514 = vsel %vm479, 1e+30, %v447
        %v515 = vsel %vm451, %v513, inf
        %v516 = vsel %vm451, %v514, inf
        %v517 = vmin.f32 %v515, %v516
        %v518 = vrot.slane %v517, 4
        %v519 = vmin.f32 %v517, %v518
        %v520 = vrot.slane %v519, 2
        %v521 = vmin.f32 %v519, %v520
        %v522 = vrot.slane %v521, 1
        %v523 = vmin.f32 %v521, %v522
        %vm524 = vcmp.le.f32.partialorder %v513, %v523
        %vm525 = vcmp.le.f32.partialorder %v514, %v523
        %v526 = vsel %vm524, %v449, 16
        %v527 = vsel %vm525, %v450, 16
        %v528 = vsel %vm451, %v526, 2147483647
        %v529 = vsel %vm451, %v527, 2147483647
        %vm530 = vcmp.lt.s32.totalorder %v528, %v529
        %v531 = vsel %vm530, %v528, %v529
        %v532 = vrot.slane %v531, 4
        %vm533 = vcmp.lt.s32.totalorder %v531, %v532
        %v534 = vsel %vm533, %v531, %v532
        %v535 = vrot.slane %v534, 2
        %vm536 = vcmp.lt.s32.totalorder %v534, %v535
        %v537 = vsel %vm536, %v534, %v535
        %v538 = vrot.slane %v537, 1
        %vm539 = vcmp.lt.s32.totalorder %v537, %v538
        %v540 = vsel %vm539, %v537, %v538
        %vm541 = vcmp.eq.s32.totalorder %v449, %v540
        %vm542 = vcmp.eq.s32.totalorder %v450, %v540
        %v543 = vrsqrt.pop %v523
        %v544 = vmul.f32 %v543, %v523
        %v545 = vmul.f32 %v544, %v543
        %v546 = vmul.f32 0.5, %v545
        %v547 = vsub.f32 1.5, %v546
        %v548 = vmul.f32 %v543, %v547
        %v549 = vmul.f32 %v523, %v548
        %vm550 = vcmp.eq.f32.partialorder %v523, inf
        %v551 = vsel %vm550, %v523, %v549
        %vm552 = vcmp.eq.f32.partialorder %v523, 0.0
        %v553 = vand.u32 %v523, 2147483648
        %v554 = vsel %vm552, %v553, %v551
        %v555 = vadd.f32 %v554, 1e-08
        %v556 = vrcp.pop %v555
        %v557 = vmul.f32 %v555, %v556
        %v558 = vsub.f32 1.0, %v557
        %v559 = vmul.f32 %v556, %v558
        %v560 = vadd.f32 %v556, %v559
        %vm561 = vweird.f32 %v555
        %vm562 = vweird.f32 %v556
        %vm563 = vmor %vm561, %vm562
        %v564 = vsel %vm563, %v556, %v560
        %v565 = vand.u32 2147483647, %v555
        %vm566 = vcmp.eq.f32.partialorder %v565, 8.507059e+37
        %v567 = vand.u32 %v555, 2147483648
        %v568 = vor.u32 1.1754944e-38, %v567
        %v569 = vsel %vm566, %v568, %v564
        %v570 = vmul.f32 1.0, %v569
        %v571 = vsel %vm541, %v570, 0.0
        %v572 = vsel %vm542, %v570, 0.0
        %v573 = vadd.f32 %v510, %v571
        %v574 = vadd.f32 %v511, %v572
        %v575 = vadd.f32 %v512, %v570
        %v576 = vsel %vm541, 1e+30, %v513
        %v577 = vsel %vm542, 1e+30, %v514
        %v578 = vsel %vm451, %v576, inf
        %v579 = vsel %vm451, %v577, inf
        %v580 = vmin.f32 %v578, %v579
        %v581 = vrot.slane %v580, 4
        %v582 = vmin.f32 %v580, %v581
        %v583 = vrot.slane %v582, 2
        %v584 = vmin.f32 %v582, %v583
        %v585 = vrot.slane %v584, 1
        %v586 = vmin.f32 %v584, %v585
        %vm587 = vcmp.le.f32.partialorder %v576, %v586
        %vm588 = vcmp.le.f32.partialorder %v577, %v586
        %v589 = vsel %vm587, %v449, 16
        %v590 = vsel %vm588, %v450, 16
        %v591 = vsel %vm451, %v589, 2147483647
        %v592 = vsel %vm451, %v590, 2147483647
        %vm593 = vcmp.lt.s32.totalorder %v591, %v592
        %v594 = vsel %vm593, %v591, %v592
        %v595 = vrot.slane %v594, 4
        %vm596 = vcmp.lt.s32.totalorder %v594, %v595
        %v597 = vsel %vm596, %v594, %v595
        %v598 = vrot.slane %v597, 2
        %vm599 = vcmp.lt.s32.totalorder %v597, %v598
        %v600 = vsel %vm599, %v597, %v598
        %v601 = vrot.slane %v600, 1
        %vm602 = vcmp.lt.s32.totalorder %v600, %v601
        %v603 = vsel %vm602, %v600, %v601
        %vm604 = vcmp.eq.s32.totalorder %v449, %v603
        %vm605 = vcmp.eq.s32.totalorder %v450, %v603
        %v606 = vrsqrt.pop %v586
        %v607 = vmul.f32 %v606, %v586
        %v608 = vmul.f32 %v607, %v606
        %v609 = vmul.f32 0.5, %v608
        %v610 = vsub.f32 1.5, %v609
        %v611 = vmul.f32 %v606, %v610
        %v612 = vmul.f32 %v586, %v611
        %vm613 = vcmp.eq.f32.partialorder %v586, inf
        %v614 = vsel %vm613, %v586, %v612
        %vm615 = vcmp.eq.f32.partialorder %v586, 0.0
        %v616 = vand.u32 %v586, 2147483648
        %v617 = vsel %vm615, %v616, %v614
        %v618 = vadd.f32 %v617, 1e-08
        %v619 = vrcp.pop %v618
        %v620 = vmul.f32 %v618, %v619
        %v621 = vsub.f32 1.0, %v620
        %v622 = vmul.f32 %v619, %v621
        %v623 = vadd.f32 %v619, %v622
        %vm624 = vweird.f32 %v618
        %vm625 = vweird.f32 %v619
        %vm626 = vmor %vm624, %vm625
        %v627 = vsel %vm626, %v619, %v623
        %v628 = vand.u32 2147483647, %v618
        %vm629 = vcmp.eq.f32.partialorder %v628, 8.507059e+37
        %v630 = vand.u32 %v618, 2147483648
        %v631 = vor.u32 1.1754944e-38, %v630
        %v632 = vsel %vm629, %v631, %v627
        %v633 = vmul.f32 1.0, %v632
        %v634 = vsel %vm604, %v633, 0.0
        %v635 = vsel %vm605, %v633, 0.0
        %v636 = vadd.f32 %v573, %v634
        %v637 = vadd.f32 %v574, %v635
        %v638 = vadd.f32 %v575, %v633
        %v639 = vld [vmem:[%s388] sm:$0xf]
        %v640 = vld [vmem:[%s388 + $0x4] sm:$0xf]
        %v641 = vld [vmem:[%s388 + $0x8] sm:$0xf]
        %v642 = vld [vmem:[%s388 + $0xc] sm:$0xf]
        %v643 = vpack.c.bf16 %v637, %v636
        %v648 = vunpack.c.l.b16 %v639
        %v649 = vunpack.c.l.b16 %v640
        %v650 = vunpack.c.l.b16 %v641
        %v651 = vunpack.c.l.b16 %v642
        %v652 = vpack.c.b16 %v649, %v648
        %v653 = vpack.c.b16 %v651, %v650
        %vm654 = vcmask 130048
        %v656 = vsel %vm654, %v652, 0
        %v659 = vsel %vm654, %v653, 0
        %661 = vmatpush.bf16.msra.mxu0 0
        %662 = vmatpush.bf16.msra.mxu0 0
        %663 = vmatpush.bf16.msra.mxu0 0
        %664 = vmatpush.bf16.msra.mxu0 0
        %665 = vmatpush.bf16.msra.mxu0 0
        %666 = vmatpush.bf16.msra.mxu0 0
        %667 = vmatpush.bf16.msra.mxu0 0
        %668 = vmatpush.bf16.msra.mxu0 %v643
        %669 = vmatmul.bf16.gmra.mxu0 %v656
        %v670 = vpop.f32.mrf.mxu0
        %v671 = vadd.f32 0.0, %v670
        %v672 = vpop.f32.mrf.mxu0
        %v673 = vadd.f32 0.0, %v672
        %674 = vmatmul.bf16.gmra.mxu0 %v659
        %v675 = vpop.f32.mrf.mxu0
        %v676 = vadd.f32 0.0, %v675
        %v677 = vpop.f32.mrf.mxu0
        %v678 = vadd.f32 0.0, %v677
        %679 = vdwg.mxu0
        %v680 = vrcp.pop %v638
        %v681 = vmul.f32 %v671, %v680
        %v682 = vmul.f32 %v673, %v680
        %v683 = vmul.f32 %v676, %v680
        %v684 = vmul.f32 %v678, %v680
        %v685 = vld [vmem:[%s4] sm:$0xf]
        %v686 = vld [vmem:[%s4 + $0x4] sm:$0xf]
        %v687 = vld [vmem:[%s4 + $0x8] sm:$0xf]
        %v688 = vld [vmem:[%s4 + $0xc] sm:$0xf]
        %v689 = vld [vmem:[%s396] sm:$0xf]
        %v690 = vld [vmem:[%s396 + $0x4] sm:$0xf]
        %v691 = vld [vmem:[%s396 + $0x8] sm:$0xf]
        %v692 = vld [vmem:[%s396 + $0xc] sm:$0xf]
        %v697 = vunpack.c.l.b16 %v685
        %v698 = vunpack.c.l.b16 %v686
        %v699 = vunpack.c.l.b16 %v687
        %v700 = vunpack.c.l.b16 %v688
        %v701 = vpack.c.b16 %v698, %v697
        %v702 = vpack.c.b16 %v700, %v699
        %v707 = vunpack.c.l.b16 %v689
        %v708 = vunpack.c.l.b16 %v690
        %v709 = vunpack.c.l.b16 %v691
        %v710 = vunpack.c.l.b16 %v692
        %v711 = vpack.c.b16 %v708, %v707
        %v712 = vpack.c.b16 %v710, %v709
        %v716 = vsel %vm451, %v701, 0
        %v719 = vsel %vm451, %v702, 0
        %721 = vmatpush.bf16.msra.mxu0 0
        %722 = vmatpush.bf16.msra.mxu0 0
        %723 = vmatpush.bf16.msra.mxu0 0
        %724 = vmatpush.bf16.msra.mxu0 0
        %725 = vmatpush.bf16.msra.mxu0 0
        %726 = vmatpush.bf16.msra.mxu0 0
        %727 = vmatpush.bf16.msra.mxu0 %v712
        %728 = vmatpush.bf16.msra.mxu0 %v711
        %729 = vmatmul.bf16.gmra.mxu0 %v716
        %v730 = vpop.f32.mrf.mxu0
        %v731 = vadd.f32 0.0, %v730
        %v732 = vpop.f32.mrf.mxu0
        %v733 = vadd.f32 0.0, %v732
        %734 = vmatmul.bf16.gmra.mxu0 %v719
        %v735 = vpop.f32.mrf.mxu0
        %v736 = vadd.f32 0.0, %v735
        %v737 = vpop.f32.mrf.mxu0
        %v738 = vadd.f32 0.0, %v737
        %739 = vdwg.mxu0
        %v740 = vadd.f32 %v681, %v731
        %v741 = vadd.f32 %v682, %v733
        %v742 = vadd.f32 %v683, %v736
        %v743 = vadd.f32 %v684, %v738
        %v744 = vld [vmem:[%s5] sm:$0xff]
        %v745 = vld [vmem:[%s5 + $0x8] sm:$0xff]
        %v746 = vld [vmem:[%s5 + $0x10] sm:$0xff]
        %v747 = vld [vmem:[%s5 + $0x18] sm:$0xff]
        %749 = vset.pattern.permute.xlu0 0
        %750 = vperm.xlu0 %749, %v744
        %v751 = vpop.permute.xlu0 %750
        %754 = vset.pattern.permute.xlu0 0
        %755 = vperm.xlu0 %754, %v745
        %v756 = vpop.permute.xlu0 %755
        %759 = vset.pattern.permute.xlu0 0
        %760 = vperm.xlu0 %759, %v746
        %v761 = vpop.permute.xlu0 %760
        %764 = vset.pattern.permute.xlu0 0
        %765 = vperm.xlu0 %764, %v747
        %v766 = vpop.permute.xlu0 %765
        %v768 = vadd.f32 %v740, %v751
        %v769 = vadd.f32 %v741, %v756
        %v770 = vadd.f32 %v742, %v761
        %v771 = vadd.f32 %v743, %v766
        %v772 = vmax.f32 %v768, 0.0
        %v773 = vmax.f32 %v769, 0.0
        %v774 = vmax.f32 %v770, 0.0
        %v775 = vmax.f32 %v771, 0.0
        %v776 = vld [vmem:[%s6] sm:$0xf]
        %v777 = vld [vmem:[%s6 + $0x4] sm:$0xf]
        %v778 = vld [vmem:[%s6 + $0x8] sm:$0xf]
        %v779 = vld [vmem:[%s6 + $0xc] sm:$0xf]
        %v780 = vpack.c.bf16 %v773, %v772
        %v781 = vpack.c.bf16 %v775, %v774
        %v782 = vld [vmem:[%s7] sm:$0xff]
        %v783 = vld [vmem:[%s7 + $0x8] sm:$0xff]
        %v784 = vld [vmem:[%s7 + $0x10] sm:$0xff]
        %v785 = vld [vmem:[%s7 + $0x18] sm:$0xff]
        %787 = vset.pattern.permute.xlu0 0
        %788 = vperm.xlu0 %787, %v782
        %v789 = vpop.permute.xlu0 %788
        %792 = vset.pattern.permute.xlu0 0
        %793 = vperm.xlu0 %792, %v783
        %v794 = vpop.permute.xlu0 %793
        %797 = vset.pattern.permute.xlu0 0
        %798 = vperm.xlu0 %797, %v784
        %v799 = vpop.permute.xlu0 %798
        %802 = vset.pattern.permute.xlu0 0
        %803 = vperm.xlu0 %802, %v785
        %v804 = vpop.permute.xlu0 %803
        %v810 = vunpack.c.l.b16 %v776
        %v811 = vunpack.c.l.b16 %v777
        %v812 = vunpack.c.l.b16 %v778
        %v813 = vunpack.c.l.b16 %v779
        %v814 = vpack.c.b16 %v811, %v810
        %v815 = vpack.c.b16 %v813, %v812
        %v817 = vsel %vm451, %v814, 0
        %v820 = vsel %vm451, %v815, 0
        %822 = vmatpush.bf16.msra.mxu0 0
        %823 = vmatpush.bf16.msra.mxu0 0
        %824 = vmatpush.bf16.msra.mxu0 0
        %825 = vmatpush.bf16.msra.mxu0 0
        %826 = vmatpush.bf16.msra.mxu0 0
        %827 = vmatpush.bf16.msra.mxu0 0
        %828 = vmatpush.bf16.msra.mxu0 %v781
        %829 = vmatpush.bf16.msra.mxu0 %v780
        %830 = vmatmul.bf16.gmra.mxu0 %v817
        %v831 = vpop.f32.mrf.mxu0
        %v832 = vadd.f32 %v789, %v831
        %v833 = vpop.f32.mrf.mxu0
        %v834 = vadd.f32 %v794, %v833
        %835 = vmatmul.bf16.gmra.mxu0 %v820
        %v836 = vpop.f32.mrf.mxu0
        %v837 = vadd.f32 %v799, %v836
        %v838 = vpop.f32.mrf.mxu0
        %v839 = vadd.f32 %v804, %v838
        %840 = vdwg.mxu0
        %v841 = vmax.f32 %v832, 0.0
        %v842 = vmax.f32 %v834, 0.0
        %v843 = vmax.f32 %v837, 0.0
        %v844 = vmax.f32 %v839, 0.0
        %v845 = vpack.c.bf16 %v841, %v841
        %v846 = vpack.c.bf16 %v842, %v842
        %v847 = vpack.c.bf16 %v843, %v843
        %v848 = vpack.c.bf16 %v844, %v844
        %vm849 = vcmask 257024
        %850 = vst.msk [vmem:[%s371] sm:$0xf] %vm849, %v845
        %851 = vst.msk [vmem:[%s371 + $0x4] sm:$0xf] %vm849, %v846
        %852 = vst.msk [vmem:[%s371 + $0x8] sm:$0xf] %vm849, %v847
        %853 = vst.msk [vmem:[%s371 + $0xc] sm:$0xf] %vm849, %v848
        %s854 = sand.u32 %s236, 1
        %s855 = scalar_lea.sflag [#allocation3], %s854
        %s856 = sand.u32 %s236, 1
        %s857 = smul.addr %s856, 16
        %s858 = scalar_lea.vmem [#allocation2], %s857
        // Predicated region
        $region53: #{tpu_custom_call.1} parent=51 // pred_check
          %p859 = pneg %p246
        $region54: #{tpu_custom_call.1} parent=51 // pred_check_branch
          %861 = sbr.rel (%p859) target = $region56
        $region55: #{tpu_custom_call.1} parent=51 // pred_region
          %863 = vsyncadd %s855, 0
          %s864 = smul.addr %s26, 4
          %s865 = sadd.s32 %s27, %s864
          %s866 = smul.addr %s865, 4
          %s867 = scalar_lea.hbm %s8, %s866
          %s868 = sshll.u32 %s858, 4
          %s869 = int_to_ptr.vmem [resolvable:$true] %s868
          %s870 = sshll.u32 %s867, 4
          %s871 = int_to_ptr.hbm [resolvable:$true] %s870
          %876 = dma.vmem_to_hbm [thread:$0]  %s869, 256, %s871, %s855, 64, 64, 4
        $region56: #{tpu_custom_call.1} parent=51 // pred_fallthru
          _
      $region52: #{tpu_custom_call.1} parent=5 // pred_fallthru
        _
      %p877 = scmp.le.s32.totalorder 2, %s17
      // Predicated region
      $region57: #{tpu_custom_call.1} parent=5 // pred_check
        %p878 = pneg %p877
      $region58: #{tpu_custom_call.1} parent=5 // pred_check_branch
        %880 = sbr.rel (%p878) target = $region60
      $region59: #{tpu_custom_call.1} parent=5 // pred_region
        %s881 = ssub.s32 %s17, 2
        // Predicated region
        $region61: #{tpu_custom_call.1} parent=59 // pred_check
          %p882 = pneg %p252
        $region62: #{tpu_custom_call.1} parent=59 // pred_check_branch
          %884 = sbr.rel (%p882) target = $region64
        $region63: #{tpu_custom_call.1} parent=59 // pred_region
          %s885 = sand.u32 %s237, 1
          %s886 = scalar_lea.sflag [#allocation3], %s885
          %s887 = sand.u32 %s237, 1
          %s888 = smul.addr %s887, 16
          %s889 = scalar_lea.vmem [#allocation2], %s888
          %891 = dma.done %s886, 256
        $region64: #{tpu_custom_call.1} parent=59 // pred_fallthru
          _
      $region60: #{tpu_custom_call.1} parent=5 // pred_fallthru
        _
    $region6: #{tpu_custom_call.1} parent=1 // loop_footer
      %s21 = sadd.s32 1, %s17
    $region7: #{tpu_custom_call.1} parent=1 // loop_footer_branch
      %16 = sbr.rel target = $region3
    $region8: #{tpu_custom_call.1} parent=1 // loop_exit
      _
    %892 = vsyncpa [#allocation3], 1
    %s893 = scalar_lea.sflag [#allocation3], 1
    %894 = vsyncpa %s893, 1

</llo_original>
